<compile_context>
chip_gen: v7x
topology: tpu7x:2x2x1
jax: 0.10.0
libtpu: 0.0.40
codegen_flags: <defaults>
</compile_context>

<pallas_src>
import functools

import jax
import jax.numpy as jnp
from jax.experimental import pallas as pl
from jax.experimental.pallas import tpu as pltpu


def _round_up(v: int, m: int) -> int:
    return ((v + m - 1) // m) * m


def _mmr_loss_kernel(d_col_ref, d_row_ref, x_ref, out_ref, acc_ref, *,
                     margin: float, fix_norm: bool, n_true: int):
    pid = pl.program_id(0)

    @pl.when(pid == 0)
    def _init():
        acc_ref[...] = jnp.zeros_like(acc_ref)

    x = x_ref[...].astype(jnp.float32)          # (TM, Ncols)  streamed tile
    d_i = d_col_ref[...].astype(jnp.float32)    # (TM, 1)      x[i, i] for this tile
    d_j = d_row_ref[...].astype(jnp.float32)    # (1, Ncols)   x[j, j] (resident)

    # Fused hinge terms for both retrieval directions (pure VPU work).
    hinge = (jnp.maximum(margin - d_i + x, 0.0)
             + jnp.maximum(margin - d_j + x, 0.0))
    acc_ref[...] += jnp.sum(hinge, keepdims=True)

    @pl.when(pid == pl.num_programs(0) - 1)
    def _finish():
        total = acc_ref[...]                               # (1, 1)
        relu_margin = max(float(margin), 0.0)              # relu(margin), static
        if fix_norm:
            # Each diagonal entry contributes exactly 2*relu(margin) to the
            # unmasked sum; remove it analytically instead of masking per tile.
            total = total - 2.0 * n_true * relu_margin
            denom = 2.0 * n_true * (n_true - 1)
        else:
            denom = 2.0 * n_true * n_true
        out_ref[...] = (total / denom).astype(jnp.float32)


def max_margin_ranking_loss(x, margin: float = 1.0, fix_norm: bool = True,
                            block_rows: int = 512):
    """Pallas TPU implementation of MaxMarginRankingLoss.forward."""
    n, m = x.shape
    assert n == m, "similarity matrix must be square"
    if fix_norm:
        assert n > 1, "fix_norm=True with n == 1 divides by zero (same as reference)"

    # Diagonal computed once in the wrapper (O(n)); passed twice so the kernel
    # needs no gather / transpose: a per-tile column and a resident row.
    d = jnp.diagonal(x).astype(jnp.float32)
    d_col = d.reshape(n, 1)
    d_row = d.reshape(1, n)

    # Lane-align columns, then pick a row-tile so the double-buffered x tile
    # stays well inside scoped VMEM (<= ~16 MiB for the 2 buffers); row tiles
    # are multiples of 8 (f32 sublane).
    n_cols = _round_up(n, 128)
    itemsize = jnp.dtype(x.dtype).itemsize
    budget = 16 * 1024 * 1024
    tm = min(int(block_rows), max(8, budget // (2 * n_cols * itemsize)))
    tm = min(tm, _round_up(n, 8))
    tm = max(8, (tm // 8) * 8)
    n_rows = _round_up(n, tm)

    pad_r = n_rows - n
    pad_c = n_cols - n
    if pad_r or pad_c:
        # Sentinel padding makes both hinge terms exactly 0 for padded entries:
        #   relu(margin - d + (-1e30)) == 0 and relu(margin - 0 + (-1e30)) == 0.
        x_in = jnp.pad(x, ((0, pad_r), (0, pad_c)), constant_values=-1e30)
        d_col_in = jnp.pad(d_col, ((0, pad_r), (0, 0)))
        d_row_in = jnp.pad(d_row, ((0, 0), (0, pad_c)))
    else:
        x_in, d_col_in, d_row_in = x, d_col, d_row

    kernel = functools.partial(
        _mmr_loss_kernel, margin=float(margin), fix_norm=bool(fix_norm), n_true=n)

    out = pl.pallas_call(
        kernel,
        out_shape=jax.ShapeDtypeStruct((1, 1), jnp.float32),
        grid_spec=pltpu.PrefetchScalarGridSpec(
            num_scalar_prefetch=0,
            grid=(n_rows // tm,),
            in_specs=[
                pl.BlockSpec((tm, 1), lambda i: (i, 0)),        # diag column tile
                pl.BlockSpec((1, n_cols), lambda i: (0, 0)),    # full diag row (resident)
                pl.BlockSpec((tm, n_cols), lambda i: (i, 0)),   # streamed x row tile
            ],
            out_specs=pl.BlockSpec((1, 1), lambda i: (0, 0)),
            scratch_shapes=[pltpu.VMEM((1, 1), jnp.float32)],
        ),
        compiler_params=pltpu.CompilerParams(
            dimension_semantics=("arbitrary",),   # loss accumulates across row tiles
            vmem_limit_bytes=48 * 1024 * 1024,
        ),
    )(d_col_in, d_row_in, x_in)
    return out[0, 0]


def _reference_loss(x, margin=1.0, fix_norm=True):
    """Pure-JAX transcription of the PyTorch forward, for verification."""
    n = x.shape[0]
    d = jnp.diag(x)
    x1 = jnp.broadcast_to(d[:, None], (n, n)).reshape(-1, 1)
    x1 = jnp.concatenate((x1, x1), axis=0)
    x2 = x.reshape(-1, 1)
    x3 = x.T.reshape(-1, 1)
    x2 = jnp.concatenate((x2, x3), axis=0)
    mm = jnp.maximum(margin - (x1 - x2), 0.0)
    if fix_norm:
        keep = jnp.ones((n, n)) - jnp.eye(n)
        keep_cat = jnp.concatenate((keep.reshape(-1, 1), keep.T.reshape(-1, 1)), axis=0)
        mm = mm * keep_cat
        return jnp.sum(mm) / jnp.sum(keep_cat)
    return jnp.mean(mm)


if __name__ == "__main__":
    key = jax.random.PRNGKey(0)
    k1, k2 = jax.random.split(key)

    # Main case: 256x256 similarity matrix, 64-row tiles -> 4 pipelined grid steps.
    n = 256
    x = jax.random.normal(k1, (n, n), dtype=jnp.float32)

    loss = jax.block_until_ready(
        max_margin_ranking_loss(x, margin=1.0, fix_norm=True, block_rows=64))
    ref = _reference_loss(x, margin=1.0, fix_norm=True)
    assert jnp.allclose(loss, ref, atol=1e-4, rtol=1e-4), (loss, ref)

    loss_nf = jax.block_until_ready(
        max_margin_ranking_loss(x, margin=1.0, fix_norm=False, block_rows=64))
    ref_nf = _reference_loss(x, margin=1.0, fix_norm=False)
    assert jnp.allclose(loss_nf, ref_nf, atol=1e-4, rtol=1e-4), (loss_nf, ref_nf)

    # Ragged size exercises the row/column padding path.
    n2 = 200
    x2 = jax.random.normal(k2, (n2, n2), dtype=jnp.float32)
    loss2 = jax.block_until_ready(
        max_margin_ranking_loss(x2, margin=1.0, fix_norm=True, block_rows=64))
    ref2 = _reference_loss(x2, margin=1.0, fix_norm=True)
    assert jnp.allclose(loss2, ref2, atol=1e-4, rtol=1e-4), (loss2, ref2)

    print("KERNEL_OK")
</pallas_src>

<mosaic_0001>
module attributes {stable_mosaic.version = 11 : i64} {
  func.func @_mmr_loss_kernel(%arg0: i32, %arg1: memref<64x1xf32, #tpu.memory_space<vmem>>, %arg2: memref<1x256xf32, #tpu.memory_space<vmem>>, %arg3: memref<64x256xf32, #tpu.memory_space<vmem>>, %arg4: memref<1x1xf32, #tpu.memory_space<vmem>>, %arg5: memref<1x1xf32, #tpu.memory_space<vmem>>) attributes {dimension_semantics = [#tpu.dimension_semantics<arbitrary>], iteration_bounds = array<i64: 4>, scalar_prefetch = 0 : i64, scratch_operands = 1 : i64, tpu.core_type = #tpu.core_type<tc>, window_params = [{transform_indices = @transform_0, window_bounds = array<i64: 64, 1>}, {pipeline_mode = #tpu.pipeline_mode<synchronous>, transform_indices = @transform_1, window_bounds = array<i64: 1, 256>}, {transform_indices = @transform_2, window_bounds = array<i64: 64, 256>}, {pipeline_mode = #tpu.pipeline_mode<synchronous>, transform_indices = @transform_3, window_bounds = array<i64: 1, 1>}]} {
    %c0_i32 = arith.constant 0 : i32
    %0 = arith.cmpi eq, %arg0, %c0_i32 : i32
    %1 = arith.extui %0 : i1 to i32
    %c0_i32_0 = arith.constant 0 : i32
    %2 = arith.cmpi ne, %1, %c0_i32_0 : i32
    scf.if %2 {
      %cst_15 = arith.constant 0.000000e+00 : f32
      %30 = vector.broadcast %cst_15 : f32 to vector<1x1xf32>
      %c0_16 = arith.constant 0 : index
      %c0_17 = arith.constant 0 : index
      %31 = vector.load %arg5[%c0_16, %c0_17] : memref<1x1xf32, #tpu.memory_space<vmem>>, vector<1x1xf32>
      tpu.vector_store %arg5[%c0_16, %c0_17], %30 {strides = array<i32>} : memref<1x1xf32, #tpu.memory_space<vmem>>, vector<1x1xf32>,
    } else {
    }
    %c0 = arith.constant 0 : index
    %c0_1 = arith.constant 0 : index
    %3 = vector.load %arg3[%c0, %c0_1] : memref<64x256xf32, #tpu.memory_space<vmem>>, vector<64x256xf32>
    %c0_2 = arith.constant 0 : index
    %c0_3 = arith.constant 0 : index
    %4 = vector.load %arg1[%c0_2, %c0_3] : memref<64x1xf32, #tpu.memory_space<vmem>>, vector<64x1xf32>
    %c0_4 = arith.constant 0 : index
    %c0_5 = arith.constant 0 : index
    %5 = vector.load %arg2[%c0_4, %c0_5] : memref<1x256xf32, #tpu.memory_space<vmem>>, vector<1x256xf32>
    %cst = arith.constant 1.000000e+00 : f32
    %6 = vector.broadcast %cst : f32 to vector<64x1xf32>
    %7 = arith.subf %6, %4 : vector<64x1xf32>
    %8 = vector.broadcast %7 : vector<64x1xf32> to vector<64x256xf32>
    %9 = arith.addf %8, %3 : vector<64x256xf32>
    %cst_6 = arith.constant 0.000000e+00 : f32
    %10 = vector.broadcast %cst_6 : f32 to vector<64x256xf32>
    %11 = arith.maximumf %9, %10 : vector<64x256xf32>
    %cst_7 = arith.constant 1.000000e+00 : f32
    %12 = vector.broadcast %cst_7 : f32 to vector<1x256xf32>
    %13 = arith.subf %12, %5 : vector<1x256xf32>
    %14 = vector.broadcast %13 : vector<1x256xf32> to vector<64x256xf32>
    %15 = arith.addf %14, %3 : vector<64x256xf32>
    %cst_8 = arith.constant 0.000000e+00 : f32
    %16 = vector.broadcast %cst_8 : f32 to vector<64x256xf32>
    %17 = arith.maximumf %15, %16 : vector<64x256xf32>
    %18 = arith.addf %11, %17 : vector<64x256xf32>
    %c0_9 = arith.constant 0 : index
    %c0_10 = arith.constant 0 : index
    %19 = vector.load %arg5[%c0_9, %c0_10] : memref<1x1xf32, #tpu.memory_space<vmem>>, vector<1x1xf32>
    %20 = vector.shape_cast %18 : vector<64x256xf32> to vector<1x64x256xf32>
    %cst_11 = arith.constant dense<0.000000e+00> : vector<1xf32>
    %21 = vector.multi_reduction <add>, %20, %cst_11 [1, 2] : vector<1x64x256xf32> to vector<1xf32>
    %22 = vector.shape_cast %21 : vector<1xf32> to vector<1x1x1xf32>
    %23 = vector.extract %22[0, 0, 0] : f32 from vector<1x1x1xf32>
    %24 = vector.broadcast %23 : f32 to vector<1x1xf32>
    %25 = arith.addf %19, %24 : vector<1x1xf32>
    %c0_12 = arith.constant 0 : index
    %c0_13 = arith.constant 0 : index
    %26 = vector.load %arg5[%c0_12, %c0_13] : memref<1x1xf32, #tpu.memory_space<vmem>>, vector<1x1xf32>
    tpu.vector_store %arg5[%c0_12, %c0_13], %25 {strides = array<i32>} : memref<1x1xf32, #tpu.memory_space<vmem>>, vector<1x1xf32>,
    %c3_i32 = arith.constant 3 : i32
    %27 = arith.cmpi eq, %arg0, %c3_i32 : i32
    %28 = arith.extui %27 : i1 to i32
    %c0_i32_14 = arith.constant 0 : i32
    %29 = arith.cmpi ne, %28, %c0_i32_14 : i32
    scf.if %29 {
      %c0_15 = arith.constant 0 : index
      %c0_16 = arith.constant 0 : index
      %30 = vector.load %arg5[%c0_15, %c0_16] : memref<1x1xf32, #tpu.memory_space<vmem>>, vector<1x1xf32>
      %cst_17 = arith.constant 5.120000e+02 : f32
      %31 = vector.broadcast %cst_17 : f32 to vector<1x1xf32>
      %32 = arith.subf %30, %31 : vector<1x1xf32>
      %cst_18 = arith.constant 1.305600e+05 : f32
      %33 = vector.broadcast %cst_18 : f32 to vector<1x1xf32>
      %34 = arith.divf %32, %33 : vector<1x1xf32>
      %c0_19 = arith.constant 0 : index
      %c0_20 = arith.constant 0 : index
      %35 = vector.load %arg4[%c0_19, %c0_20] : memref<1x1xf32, #tpu.memory_space<vmem>>, vector<1x1xf32>
      tpu.vector_store %arg4[%c0_19, %c0_20], %34 {strides = array<i32>} : memref<1x1xf32, #tpu.memory_space<vmem>>, vector<1x1xf32>,
    } else {
    }
    return
  }
  func.func @transform_0(%arg0: i32) -> (i32, i32) {
    %c0_i32 = arith.constant 0 : i32
    %c0_i32_0 = arith.constant 0 : i32
    return %arg0, %c0_i32 : i32, i32
  }
  func.func @transform_1(%arg0: i32) -> (i32, i32) {
    %c0_i32 = arith.constant 0 : i32
    %c0_i32_0 = arith.constant 0 : i32
    %c0_i32_1 = arith.constant 0 : i32
    return %c0_i32, %c0_i32_0 : i32, i32
  }
  func.func @transform_2(%arg0: i32) -> (i32, i32) {
    %c0_i32 = arith.constant 0 : i32
    %c0_i32_0 = arith.constant 0 : i32
    return %arg0, %c0_i32 : i32, i32
  }
  func.func @transform_3(%arg0: i32) -> (i32, i32) {
    %c0_i32 = arith.constant 0 : i32
    %c0_i32_0 = arith.constant 0 : i32
    %c0_i32_1 = arith.constant 0 : i32
    return %c0_i32, %c0_i32_0 : i32, i32
  }
}

</mosaic_0001>

<llo_original>
// kernel: tpu_custom_call.1
$region0: #{tpu_custom_call.1}
  #allocation0 [shape = 'u32[]', space=smem, size = 0x4, offset = 0x4, fixed_abs, tag = 'smem constant byte address 0x4 - core index']
  #allocation1 [shape = 'u32[144,128]{1,0:T(1,128)}', space=vmem, size = 0x12000, scoped, tag = 'internal scratch']
  #allocation2 [shape = 'f32[1,1]{1,0:T(1,128)}', space=vmem, size = 0x200, scoped, tag = 'scratch operand']
  %s0 = inlined_call_operand.vmem [shape: f32[256,1], index: 0, kind: input, shape index: {}]
  %s1 = inlined_call_operand.vmem [shape: f32[1,256], index: 1, kind: input, shape index: {}]
  %s2 = inlined_call_operand.hbm [shape: f32[256,256], index: 2, kind: input, shape index: {}]
  %s3 = inlined_call_operand.hbm [shape: f32[1,1], index: 3, kind: output, shape index: {}]
  %s4 = sld [smem:[#allocation0]]
  $region57: #{tpu_custom_call.1} parent=0
    _
  %s6 = ssub.s32 1, %s4
  %s7 = scalar_select 0, %s6, %s4
  $region1: #{tpu_custom_call.1} parent=0
    #allocation3 [shape = 'u8[131072]{0}', space=vmem, size = 0x20000, scoped, tag = 'input window, operand 2']
    #allocation4 [shape = 's32[2]{0}', space=sflag, size = 0x8, scoped, tag = 'scoped memory for tpu_custom_call.1']
    #allocation5 [shape = 's32[2]{0}', space=sflag, size = 0x8, scoped, tag = 'scoped memory for tpu_custom_call.1']
    #allocation6 [shape = 'u8[512]{0}', space=vmem, size = 0x400, scoped, tag = 'output window, operand 0, single buffered']
    %8 = vsyncpa [#allocation4], 0
    %s9 = scalar_lea.sflag [#allocation4], 1
    %10 = vsyncpa %s9, 0
    %11 = vsyncpa [#allocation5], 0
    loop: start=0, step=1, limit=6
    $region2: #{tpu_custom_call.1} parent=1 // loop_pre_header
      _
    $region3: #{tpu_custom_call.1} parent=1 // loop_header
      %s13 = sphi 0, %s17
      %p14 = scmp.ge.s32.totalorder %s13, 6
      %s23 = sphi 0, %s25
      %s26 = sphi 0, %s23
      %s27 = sphi 0, %s26
      %s43 = sphi 0, %s27
      %s47 = sphi 0, %s47
      %s49 = sphi 0, %s47
      %s50 = sphi 0, %s49
      %s64 = sphi 0, %s50
      %s70 = sphi 0, %s72
      %s73 = sphi 0, %s70
      %s74 = sphi 0, %s73
      %s90 = sphi 0, %s74
      %s94 = sphi 0, %s94
      %s96 = sphi 0, %s94
      %s97 = sphi 0, %s96
      %s111 = sphi 0, %s97
    $region4: #{tpu_custom_call.1} parent=1 // loop_header_branch
      %16 = sbr.rel (%p14) target = $region8
    $region5: #{tpu_custom_call.1} parent=1 // loop_body
      %s18 = ssub.s32 %s13, 1
      %s19 = ssub.s32 %s13, 2
      %s20 = sadd.s32 %s13, 1
      %s21 = ssub.s32 %s13, %s20
      %p22 = scmp.eq.s32.totalorder %s21, 0
      %s24 = sadd.s32 %s23, 1
      %s25 = scalar_select %p22, %s23, %s24
      %p28 = pneg %p22
      %p29 = scmp.eq.s32.totalorder %s13, 3
      %p30 = por %p28, %p29
      %p31 = scmp.ne.s32.totalorder %s23, %s26
      %p32 = scmp.eq.s32.totalorder %s13, 0
      %p33 = por %p31, %p32
      %p34 = scmp.ne.s32.totalorder %s23, %s26
      %p35 = scmp.eq.s32.totalorder %s18, 3
      %p36 = por %p34, %p35
      %p37 = scmp.ne.s32.totalorder %s26, %s27
      %p38 = scmp.eq.s32.totalorder %s18, 0
      %p39 = por %p37, %p38
      %p40 = scmp.ne.s32.totalorder %s26, %s27
      %p41 = scmp.eq.s32.totalorder %s19, 3
      %p42 = por %p40, %p41
      %p44 = scmp.ne.s32.totalorder %s27, %s43
      %p45 = scmp.eq.s32.totalorder %s19, 0
      %p46 = por %p44, %p45
      %s48 = sadd.s32 %s47, 1
      %p51 = scmp.eq.s32.totalorder %s13, 3
      %p52 = scmp.ne.s32.totalorder %s47, %s49
      %p53 = scmp.eq.s32.totalorder %s13, 0
      %p54 = por %p52, %p53
      %p55 = scmp.ne.s32.totalorder %s47, %s49
      %p56 = scmp.eq.s32.totalorder %s18, 3
      %p57 = por %p55, %p56
      %p58 = scmp.ne.s32.totalorder %s49, %s50
      %p59 = scmp.eq.s32.totalorder %s18, 0
      %p60 = por %p58, %p59
      %p61 = scmp.ne.s32.totalorder %s49, %s50
      %p62 = scmp.eq.s32.totalorder %s19, 3
      %p63 = por %p61, %p62
      %p65 = scmp.ne.s32.totalorder %s50, %s64
      %p66 = scmp.eq.s32.totalorder %s19, 0
      %p67 = por %p65, %p66
      %s68 = ssub.s32 %s13, %s20
      %p69 = scmp.eq.s32.totalorder %s68, 0
      %s71 = sadd.s32 %s70, 1
      %s72 = scalar_select %p69, %s70, %s71
      %p75 = pneg %p69
      %p76 = scmp.eq.s32.totalorder %s13, 3
      %p77 = por %p75, %p76
      %p78 = scmp.ne.s32.totalorder %s70, %s73
      %p79 = scmp.eq.s32.totalorder %s13, 0
      %p80 = por %p78, %p79
      %p81 = scmp.ne.s32.totalorder %s70, %s73
      %p82 = scmp.eq.s32.totalorder %s18, 3
      %p83 = por %p81, %p82
      %p84 = scmp.ne.s32.totalorder %s73, %s74
      %p85 = scmp.eq.s32.totalorder %s18, 0
      %p86 = por %p84, %p85
      %p87 = scmp.ne.s32.totalorder %s73, %s74
      %p88 = scmp.eq.s32.totalorder %s19, 3
      %p89 = por %p87, %p88
      %p91 = scmp.ne.s32.totalorder %s74, %s90
      %p92 = scmp.eq.s32.totalorder %s19, 0
      %p93 = por %p91, %p92
      %s95 = sadd.s32 %s94, 1
      %p98 = scmp.eq.s32.totalorder %s13, 3
      %p99 = scmp.ne.s32.totalorder %s94, %s96
      %p100 = scmp.eq.s32.totalorder %s13, 0
      %p101 = por %p99, %p100
      %p102 = scmp.ne.s32.totalorder %s94, %s96
      %p103 = scmp.eq.s32.totalorder %s18, 3
      %p104 = por %p102, %p103
      %p105 = scmp.ne.s32.totalorder %s96, %s97
      %p106 = scmp.eq.s32.totalorder %s18, 0
      %p107 = por %p105, %p106
      %p108 = scmp.ne.s32.totalorder %s96, %s97
      %p109 = scmp.eq.s32.totalorder %s19, 3
      %p110 = por %p108, %p109
      %p112 = scmp.ne.s32.totalorder %s97, %s111
      %p113 = scmp.eq.s32.totalorder %s19, 0
      %p114 = por %p112, %p113
      %p115 = scmp.le.s32.totalorder 1, %s13
      %p116 = scmp.lt.s32.totalorder %s13, 5
      %p117 = pnand %p115, %p116
      %p118 = pneg %p117
      // Predicated region
      $region9: #{tpu_custom_call.1} parent=5 // pred_check
        _
      $region10: #{tpu_custom_call.1} parent=5 // pred_check_branch
        %120 = sbr.rel (%p117) target = $region12
      $region11: #{tpu_custom_call.1} parent=5 // pred_region
        %s121 = ssub.s32 %s13, 1
        // Predicated region
        $region13: #{tpu_custom_call.1} parent=11 // pred_check
          %p122 = pneg %p60
        $region14: #{tpu_custom_call.1} parent=11 // pred_check_branch
          %124 = sbr.rel (%p122) target = $region16
        $region15: #{tpu_custom_call.1} parent=11 // pred_region
          _
        $region16: #{tpu_custom_call.1} parent=11 // pred_fallthru
          _
      $region12: #{tpu_custom_call.1} parent=5 // pred_fallthru
        _
      %p125 = scmp.lt.s32.totalorder %s13, 4
      // Predicated region
      $region17: #{tpu_custom_call.1} parent=5 // pred_check
        %p126 = pneg %p125
      $region18: #{tpu_custom_call.1} parent=5 // pred_check_branch
        %128 = sbr.rel (%p126) target = $region20
      $region19: #{tpu_custom_call.1} parent=5 // pred_region
        // Predicated region
        $region21: #{tpu_custom_call.1} parent=19 // pred_check
          %p129 = pneg %p33
        $region22: #{tpu_custom_call.1} parent=19 // pred_check_branch
          %131 = sbr.rel (%p129) target = $region24
        $region23: #{tpu_custom_call.1} parent=19 // pred_region
          %s132 = smul.u32 8, %s13
          %p133 = scmp.lt.s32.totalorder %s132, 31
          %s134 = scalar_select %p133, %s132, 31
          %s135 = smul.addr %s134, 8
          %s136 = scalar_lea.vmem %s0, %s135
          %s137 = smul.u32 8, %s13
        $region24: #{tpu_custom_call.1} parent=19 // pred_fallthru
          _
        // Predicated region
        $region25: #{tpu_custom_call.1} parent=19 // pred_check
          %p138 = pneg %p80
        $region26: #{tpu_custom_call.1} parent=19 // pred_check_branch
          %140 = sbr.rel (%p138) target = $region28
        $region27: #{tpu_custom_call.1} parent=19 // pred_region
          %s141 = sand.u32 %s70, 1
          %s142 = scalar_lea.sflag [#allocation4], %s141
          %s143 = sand.u32 %s70, 1
          %s144 = smul.addr %s143, 128
          %s145 = scalar_lea.vmem [#allocation3], %s144
          %s146 = smul.u32 8, %s13
          %s148 = ssub.s32 2048, 2048
          %149 = vsyncadd %s142, %s148
          %s150 = smul.addr %s146, 2
          %s151 = smul.addr %s150, 128
          %s152 = scalar_lea.hbm %s2, %s151
          %s153 = sshll.u32 %s145, 4
          %s154 = int_to_ptr.vmem [resolvable:$true] %s153
          %159 = dma.hbm_to_vmem [thread:$0]  %s152, 2048, %s154, %s142, 256, 256, 16
        $region28: #{tpu_custom_call.1} parent=19 // pred_fallthru
          _
      $region20: #{tpu_custom_call.1} parent=5 // pred_fallthru
        _
      %p160 = scmp.le.s32.totalorder 1, %s13
      %p161 = scmp.lt.s32.totalorder %s13, 5
      %p162 = pnand %p160, %p161
      %p163 = pneg %p162
      // Predicated region
      $region29: #{tpu_custom_call.1} parent=5 // pred_check
        _
      $region30: #{tpu_custom_call.1} parent=5 // pred_check_branch
        %165 = sbr.rel (%p162) target = $region32
      $region31: #{tpu_custom_call.1} parent=5 // pred_region
        %s166 = ssub.s32 %s13, 1
        %s167 = sand.u32 %s73, 1
        %s168 = scalar_lea.sflag [#allocation4], %s167
        %s169 = sand.u32 %s73, 1
        %s170 = smul.addr %s169, 128
        %s171 = scalar_lea.vmem [#allocation3], %s170
        // Predicated region
        $region33: #{tpu_custom_call.1} parent=31 // pred_check
          %p172 = pneg %p86
        $region34: #{tpu_custom_call.1} parent=31 // pred_check_branch
          %174 = sbr.rel (%p172) target = $region36
        $region35: #{tpu_custom_call.1} parent=31 // pred_region
          %175 = dma.done %s168, 2048
        $region36: #{tpu_custom_call.1} parent=31 // pred_fallthru
          _
        %s176 = smul.u32 8, %s18
        %p177 = scmp.lt.s32.totalorder %s176, 31
        %s178 = scalar_select %p177, %s176, 31
        %s179 = smul.addr %s178, 8
        %s180 = scalar_lea.vmem %s0, %s179
        %p181 = pneg %p39
        %p182 = pneg %p36
        %p183 = pneg %p60
        %p184 = pneg %p57
        %s185 = sand.u32 %s73, 1
        %s186 = scalar_lea.sflag [#allocation4], %s185
        %s187 = sand.u32 %s73, 1
        %s188 = smul.addr %s187, 128
        %s189 = scalar_lea.vmem [#allocation3], %s188
        %p190 = pneg %p86
        %p191 = pneg %p83
        %p192 = pneg %p107
        %p193 = pneg %p104
        %s194 = smul.u32 8, %s18
        %p195 = scmp.lt.s32.totalorder %s194, 31
        %s196 = scalar_select %p195, %s194, 31
        %s197 = smul.addr %s196, 8
        %s198 = scalar_lea.vmem %s0, %s197
        %s199 = smul.u32 8, %s18
        %s200 = smul.u32 8, %s18
        %p201 = scmp.eq.s32.totalorder %s18, 0
        // Predicated region
        $region37: #{tpu_custom_call.1} parent=31 // pred_check
          %p202 = pneg %p201
        $region38: #{tpu_custom_call.1} parent=31 // pred_check_branch
          %204 = sbr.rel (%p202) target = $region40
        $region39: #{tpu_custom_call.1} parent=31 // pred_region
          %vm205 = vcmask 0
          %206 = vst.msk [vmem:[#allocation2] sm:$0x1] %vm205, 0.0
        $region40: #{tpu_custom_call.1} parent=31 // pred_fallthru
          _
        %v207 = vld [vmem:[%s171] sm:$0xff]
        %v208 = vld [vmem:[%s171 + $0x8] sm:$0xff]
        %v209 = vld [vmem:[%s171 + $0x10] sm:$0xff]
        %v210 = vld [vmem:[%s171 + $0x18] sm:$0xff]
        %v211 = vld [vmem:[%s171 + $0x20] sm:$0xff]
        %v212 = vld [vmem:[%s171 + $0x28] sm:$0xff]
        %v213 = vld [vmem:[%s171 + $0x30] sm:$0xff]
        %v214 = vld [vmem:[%s171 + $0x38] sm:$0xff]
        %v215 = vld [vmem:[%s171 + $0x40] sm:$0xff]
        %v216 = vld [vmem:[%s171 + $0x48] sm:$0xff]
        %v217 = vld [vmem:[%s171 + $0x50] sm:$0xff]
        %v218 = vld [vmem:[%s171 + $0x58] sm:$0xff]
        %v219 = vld [vmem:[%s171 + $0x60] sm:$0xff]
        %v220 = vld [vmem:[%s171 + $0x68] sm:$0xff]
        %v221 = vld [vmem:[%s171 + $0x70] sm:$0xff]
        %v222 = vld [vmem:[%s171 + $0x78] sm:$0xff]
        %v223 = vld [vmem:[%s198] sm:$0xff]
        %v224 = vld [vmem:[%s198 + $0x8] sm:$0xff]
        %v225 = vld [vmem:[%s198 + $0x10] sm:$0xff]
        %v226 = vld [vmem:[%s198 + $0x18] sm:$0xff]
        %v227 = vld [vmem:[%s198 + $0x20] sm:$0xff]
        %v228 = vld [vmem:[%s198 + $0x28] sm:$0xff]
        %v229 = vld [vmem:[%s198 + $0x30] sm:$0xff]
        %v230 = vld [vmem:[%s198 + $0x38] sm:$0xff]
        %v231 = vld [vmem:[%s1] sm:$0x3]
        %v232 = vsub.f32 1.0, %v223
        %v233 = vsub.f32 1.0, %v224
        %v234 = vsub.f32 1.0, %v225
        %v235 = vsub.f32 1.0, %v226
        %v236 = vsub.f32 1.0, %v227
        %v237 = vsub.f32 1.0, %v228
        %v238 = vsub.f32 1.0, %v229
        %v239 = vsub.f32 1.0, %v230
        %241 = vset.pattern.permute.xlu0 0
        %242 = vperm.xlu0 %241, %v232
        %v243 = vpop.permute.xlu0 %242
        %246 = vset.pattern.permute.xlu0 0
        %247 = vperm.xlu0 %246, %v233
        %v248 = vpop.permute.xlu0 %247
        %251 = vset.pattern.permute.xlu0 0
        %252 = vperm.xlu0 %251, %v234
        %v253 = vpop.permute.xlu0 %252
        %256 = vset.pattern.permute.xlu0 0
        %257 = vperm.xlu0 %256, %v235
        %v258 = vpop.permute.xlu0 %257
        %261 = vset.pattern.permute.xlu0 0
        %262 = vperm.xlu0 %261, %v236
        %v263 = vpop.permute.xlu0 %262
        %266 = vset.pattern.permute.xlu0 0
        %267 = vperm.xlu0 %266, %v237
        %v268 = vpop.permute.xlu0 %267
        %271 = vset.pattern.permute.xlu0 0
        %272 = vperm.xlu0 %271, %v238
        %v273 = vpop.permute.xlu0 %272
        %276 = vset.pattern.permute.xlu0 0
        %277 = vperm.xlu0 %276, %v239
        %v278 = vpop.permute.xlu0 %277
        %v280 = vadd.f32 %v243, %v207
        %v281 = vadd.f32 %v243, %v208
        %v282 = vadd.f32 %v248, %v209
        %v283 = vadd.f32 %v248, %v210
        %v284 = vadd.f32 %v253, %v211
        %v285 = vadd.f32 %v253, %v212
        %v286 = vadd.f32 %v258, %v213
        %v287 = vadd.f32 %v258, %v214
        %v288 = vadd.f32 %v263, %v215
        %v289 = vadd.f32 %v263, %v216
        %v290 = vadd.f32 %v268, %v217
        %v291 = vadd.f32 %v268, %v218
        %v292 = vadd.f32 %v273, %v219
        %v293 = vadd.f32 %v273, %v220
        %v294 = vadd.f32 %v278, %v221
        %v295 = vadd.f32 %v278, %v222
        %v296 = vmax.f32 %v280, 0.0
        %v297 = vmax.f32 %v281, 0.0
        %v298 = vmax.f32 %v282, 0.0
        %v299 = vmax.f32 %v283, 0.0
        %v300 = vmax.f32 %v284, 0.0
        %v301 = vmax.f32 %v285, 0.0
        %v302 = vmax.f32 %v286, 0.0
        %v303 = vmax.f32 %v287, 0.0
        %v304 = vmax.f32 %v288, 0.0
        %v305 = vmax.f32 %v289, 0.0
        %v306 = vmax.f32 %v290, 0.0
        %v307 = vmax.f32 %v291, 0.0
        %v308 = vmax.f32 %v292, 0.0
        %v309 = vmax.f32 %v293, 0.0
        %v310 = vmax.f32 %v294, 0.0
        %v311 = vmax.f32 %v295, 0.0
        %v312 = vsub.f32 1.0, %v231
        %v314 = vlaneseq
        %v315 = vshrl.u32 %v314, 7
        %v316 = vsub.s32 0, %v315
        %v317 = vrot.slane %v312, %v316
        %v318 = vlaneseq
        %v319 = vshrl.u32 %v318, 7
        %v320 = vsub.s32 1, %v319
        %v321 = vrot.slane %v312, %v320
        %v324 = vadd.f32 %v317, %v207
        %v325 = vadd.f32 %v321, %v208
        %v326 = vadd.f32 %v317, %v209
        %v327 = vadd.f32 %v321, %v210
        %v328 = vadd.f32 %v317, %v211
        %v329 = vadd.f32 %v321, %v212
        %v330 = vadd.f32 %v317, %v213
        %v331 = vadd.f32 %v321, %v214
        %v332 = vadd.f32 %v317, %v215
        %v333 = vadd.f32 %v321, %v216
        %v334 = vadd.f32 %v317, %v217
        %v335 = vadd.f32 %v321, %v218
        %v336 = vadd.f32 %v317, %v219
        %v337 = vadd.f32 %v321, %v220
        %v338 = vadd.f32 %v317, %v221
        %v339 = vadd.f32 %v321, %v222
        %v340 = vmax.f32 %v324, 0.0
        %v341 = vmax.f32 %v325, 0.0
        %v342 = vmax.f32 %v326, 0.0
        %v343 = vmax.f32 %v327, 0.0
        %v344 = vmax.f32 %v328, 0.0
        %v345 = vmax.f32 %v329, 0.0
        %v346 = vmax.f32 %v330, 0.0
        %v347 = vmax.f32 %v331, 0.0
        %v348 = vmax.f32 %v332, 0.0
        %v349 = vmax.f32 %v333, 0.0
        %v350 = vmax.f32 %v334, 0.0
        %v351 = vmax.f32 %v335, 0.0
        %v352 = vmax.f32 %v336, 0.0
        %v353 = vmax.f32 %v337, 0.0
        %v354 = vmax.f32 %v338, 0.0
        %v355 = vmax.f32 %v339, 0.0
        %v356 = vadd.f32 %v296, %v340
        %v357 = vadd.f32 %v297, %v341
        %v358 = vadd.f32 %v298, %v342
        %v359 = vadd.f32 %v299, %v343
        %v360 = vadd.f32 %v300, %v344
        %v361 = vadd.f32 %v301, %v345
        %v362 = vadd.f32 %v302, %v346
        %v363 = vadd.f32 %v303, %v347
        %v364 = vadd.f32 %v304, %v348
        %v365 = vadd.f32 %v305, %v349
        %v366 = vadd.f32 %v306, %v350
        %v367 = vadd.f32 %v307, %v351
        %v368 = vadd.f32 %v308, %v352
        %v369 = vadd.f32 %v309, %v353
        %v370 = vadd.f32 %v310, %v354
        %v371 = vadd.f32 %v311, %v355
        %v372 = vld [vmem:[#allocation2] sm:$0x1]
        %v373 = vadd.f32 %v356, %v357
        %v374 = vadd.f32 %v373, %v358
        %v375 = vadd.f32 %v374, %v359
        %v376 = vadd.f32 %v375, %v360
        %v377 = vadd.f32 %v376, %v361
        %v378 = vadd.f32 %v377, %v362
        %v379 = vadd.f32 %v378, %v363
        %v380 = vadd.f32 %v379, %v364
        %v381 = vadd.f32 %v380, %v365
        %v382 = vadd.f32 %v381, %v366
        %v383 = vadd.f32 %v382, %v367
        %v384 = vadd.f32 %v383, %v368
        %v385 = vadd.f32 %v384, %v369
        %v386 = vadd.f32 %v385, %v370
        %v387 = vadd.f32 %v386, %v371
        %388 = vadd.xlane.f32.xlu0 %v387
        %v389 = vpop.xlane.xlu0 %388
        %v390 = vrot.slane %v389, 4
        %v391 = vadd.f32 %v389, %v390
        %v392 = vrot.slane %v391, 2
        %v393 = vadd.f32 %v391, %v392
        %v394 = vrot.slane %v393, 1
        %v395 = vadd.f32 %v393, %v394
        %s396 = vtos %v395
        %v397 = vstv %s396
        %v398 = vadd.f32 %v372, %v397
        %vm399 = vcmask 0
        %400 = vst.msk [vmem:[#allocation2] sm:$0x1] %vm399, %v398
        %p401 = scmp.eq.s32.totalorder %s18, 3
        // Predicated region
        $region41: #{tpu_custom_call.1} parent=31 // pred_check
          %p402 = pneg %p401
        $region42: #{tpu_custom_call.1} parent=31 // pred_check_branch
          %404 = sbr.rel (%p402) target = $region44
        $region43: #{tpu_custom_call.1} parent=31 // pred_region
          %v405 = vld [vmem:[#allocation2] sm:$0x1]
          %v406 = vsub.f32 %v405, 512.0
          %v407 = vrcp.pop 130560.0
          %v408 = vmul.f32 %v406, %v407
          %409 = vst.msk [vmem:[#allocation6] sm:$0x1] %vm399, %v408
        $region44: #{tpu_custom_call.1} parent=31 // pred_fallthru
          _
        // Predicated region
        $region45: #{tpu_custom_call.1} parent=31 // pred_check
          %p410 = pneg %p104
        $region46: #{tpu_custom_call.1} parent=31 // pred_check_branch
          %412 = sbr.rel (%p410) target = $region48
        $region47: #{tpu_custom_call.1} parent=31 // pred_region
          %s414 = ssub.s32 16, 16
          %415 = vsyncadd [#allocation5], %s414
          %s417 = sshll.u32 [#allocation6], 4
          %s418 = int_to_ptr.vmem [resolvable:$true] %s417
          %420 = dma.vmem_to_hbm [thread:$0]  %s418, 16, %s3, [#allocation5]
        $region48: #{tpu_custom_call.1} parent=31 // pred_fallthru
          _
        // Predicated region
        $region49: #{tpu_custom_call.1} parent=31 // pred_check
          %p421 = pneg %p104
        $region50: #{tpu_custom_call.1} parent=31 // pred_check_branch
          %423 = sbr.rel (%p421) target = $region52
        $region51: #{tpu_custom_call.1} parent=31 // pred_region
          %424 = dma.done [#allocation5], 16
        $region52: #{tpu_custom_call.1} parent=31 // pred_fallthru
          _
      $region32: #{tpu_custom_call.1} parent=5 // pred_fallthru
        _
      %p425 = scmp.le.s32.totalorder 2, %s13
      // Predicated region
      $region53: #{tpu_custom_call.1} parent=5 // pred_check
        %p426 = pneg %p425
      $region54: #{tpu_custom_call.1} parent=5 // pred_check_branch
        %428 = sbr.rel (%p426) target = $region56
      $region55: #{tpu_custom_call.1} parent=5 // pred_region
        %s429 = ssub.s32 %s13, 2
      $region56: #{tpu_custom_call.1} parent=5 // pred_fallthru
        _
    $region6: #{tpu_custom_call.1} parent=1 // loop_footer
      %s17 = sadd.s32 1, %s13
    $region7: #{tpu_custom_call.1} parent=1 // loop_footer_branch
      %12 = sbr.rel target = $region3
    $region8: #{tpu_custom_call.1} parent=1 // loop_exit
      _
    %430 = vsyncpa [#allocation4], 1
    %s431 = scalar_lea.sflag [#allocation4], 1
    %432 = vsyncpa %s431, 1
    %433 = vsyncpa [#allocation5], 1
    %s434 = scalar_lea.sflag [#allocation5], 1
    %435 = vsyncpa %s434, 1

</llo_original>
